<compile_context>
chip_gen: v7x
topology: tpu7x:2x2x1
jax: 0.10.0
libtpu: 0.0.40
codegen_flags: <defaults>
</compile_context>

<pallas_src>
import math

import jax
import jax.numpy as jnp
from jax.experimental import pallas as pl
from jax.experimental.pallas import tpu as pltpu


def last_atten_kernel(x_ref, wkv_ref, vecs_ref, w1_ref, w2_ref, o_ref):
    """Bb batch rows per step: fused K/V projection, attention pooling,
    LayerNorm and 2-layer MLP."""
    Bb, OUT = o_ref.shape                  # static
    S = x_ref.shape[0] // Bb               # static

    # Fused K/V projection: one MXU matmul with M = Bb*S, N = 2*OUT.
    x2 = x_ref[...]                                                     # (Bb*S, IN)
    kv = jnp.dot(x2, wkv_ref[...], preferred_element_type=jnp.float32)  # (Bb*S, 2*OUT)
    kv3 = kv.reshape(Bb, S, 2 * OUT)
    k = kv3[:, :, :OUT]                                                 # (Bb, S, OUT)
    v = kv3[:, :, OUT:]                                                 # (Bb, S, OUT)

    # Attention scores: broadcast-mul + lane reduce (VPU + XLU, no k.T, no MXU GEMV).
    q = vecs_ref[0:1, :]                                                # (1, OUT), pre-scaled by 1/sqrt(OUT)
    scores = jnp.sum(k * q, axis=-1, keepdims=True)                     # (Bb, S, 1)

    # Softmax over the sequence (sublane) axis.
    m = jnp.max(scores, axis=1, keepdims=True)                          # (Bb, 1, 1)
    e = jnp.exp(scores - m)                                             # (Bb, S, 1)
    attn = e / jnp.sum(e, axis=1, keepdims=True)                        # (Bb, S, 1)

    # Attention pooling: lane-broadcast of attn + sublane reduce.
    pooled = jnp.sum(attn * v, axis=1)                                  # (Bb, OUT)

    gamma = vecs_ref[1:2, :]                                            # (1, OUT)
    beta = vecs_ref[2:3, :]
    b1 = vecs_ref[3:4, :]
    b2 = vecs_ref[4:5, :]

    # LayerNorm(out_size), eps = 1e-5 (PyTorch default), biased variance.
    mu = jnp.mean(pooled, axis=-1, keepdims=True)
    var = jnp.mean((pooled - mu) ** 2, axis=-1, keepdims=True)
    ln = (pooled - mu) * jax.lax.rsqrt(var + 1e-5) * gamma + beta       # (Bb, OUT)

    # Linear -> ReLU -> Linear (Dropout is identity in eval mode).  M = Bb rows.
    h = jnp.dot(ln, w1_ref[...], preferred_element_type=jnp.float32) + b1
    h = jnp.maximum(h, 0.0)
    y = jnp.dot(h, w2_ref[...], preferred_element_type=jnp.float32) + b2

    o_ref[...] = y.astype(o_ref.dtype)


def last_atten(x, params):
    """x: (seq, batch, in_size) float32 — PyTorch input layout."""
    S, B, IN = x.shape
    OUT = params["q"].shape[0]

    # ---- glue: layout / weight preprocessing (outside the kernel) ----
    xb = jnp.transpose(x, (1, 0, 2))                         # (B, S, IN)

    # Fused K/V projection weight: (IN, 2*OUT).
    wkv = jnp.concatenate([params["Kw"].T, params["Vw"].T], axis=1)
    w1_t = params["W1"].T                                    # (OUT, OUT)
    w2_t = params["W2"].T                                    # (OUT, OUT)

    # Pack the five small per-feature vectors into one (8, OUT) array.
    q_scaled = params["q"] / jnp.float32(math.sqrt(OUT))     # same order as torch (q/sqrt) @ k^T
    vecs = jnp.zeros((8, OUT), jnp.float32)
    vecs = vecs.at[0].set(q_scaled)
    vecs = vecs.at[1].set(params["ln_g"])
    vecs = vecs.at[2].set(params["ln_b"])
    vecs = vecs.at[3].set(params["b1"])
    vecs = vecs.at[4].set(params["b2"])

    # Batch blocking: fold up to 8 batch rows into each grid step.
    Bb = min(B, 8)
    n_blocks = pl.cdiv(B, Bb)
    B_pad = n_blocks * Bb
    if B_pad != B:
        xb = jnp.pad(xb, ((0, B_pad - B), (0, 0), (0, 0)))
    x_flat = xb.reshape(B_pad * S, IN)                       # batch folded into M

    grid_spec = pltpu.PrefetchScalarGridSpec(
        num_scalar_prefetch=0,
        grid=(n_blocks,),
        in_specs=[
            pl.BlockSpec((Bb * S, IN), lambda i: (i, 0)),    # x rows for this batch block
            pl.BlockSpec((IN, 2 * OUT), lambda i: (0, 0)),   # fused [Kw^T | Vw^T]
            pl.BlockSpec((8, OUT), lambda i: (0, 0)),        # packed q / gamma / beta / b1 / b2
            pl.BlockSpec((OUT, OUT), lambda i: (0, 0)),      # W1^T
            pl.BlockSpec((OUT, OUT), lambda i: (0, 0)),      # W2^T
        ],
        out_specs=pl.BlockSpec((Bb, OUT), lambda i: (i, 0)), # lane-dense 2D output block
    )

    # Advisory cost estimate for XLA scheduling around this micro-kernel.
    flops = (2 * B_pad * S * IN * (2 * OUT)       # fused kv matmul
             + 4 * B_pad * S * OUT                # scores + pooling
             + 2 * 2 * B_pad * OUT * OUT          # two MLP matmuls
             + 10 * B_pad * OUT)                  # LN / bias / relu elementwise
    bytes_accessed = 4 * (x_flat.size + wkv.size + vecs.size
                          + w1_t.size + w2_t.size + B_pad * OUT)
    cost = pl.CostEstimate(flops=flops,
                           transcendentals=B_pad * (S + 1),
                           bytes_accessed=bytes_accessed)

    out2d = pl.pallas_call(
        last_atten_kernel,
        out_shape=jax.ShapeDtypeStruct((B_pad, OUT), jnp.float32),
        grid_spec=grid_spec,
        compiler_params=pltpu.CompilerParams(dimension_semantics=("parallel",)),
        cost_estimate=cost,
    )(x_flat, wkv, vecs, w1_t, w2_t)

    return out2d[:B].reshape(B, 1, OUT)


if __name__ == "__main__":
    S, B, IN, OUT = 8, 2, 32, 32

    key = jax.random.PRNGKey(0)
    ks = jax.random.split(key, 8)

    def unif(k, shape, scale):
        return jax.random.uniform(k, shape, jnp.float32, -scale, scale)

    stdv_in = 1.0 / math.sqrt(IN)
    stdv_out = 1.0 / math.sqrt(OUT)
    params = {
        "Kw": unif(ks[0], (OUT, IN), stdv_in),       # nn.Linear(in, out, bias=False).weight
        "Vw": unif(ks[1], (OUT, IN), stdv_in),
        "q": unif(ks[2], (OUT,), stdv_out),          # attention query parameter
        "ln_g": jnp.ones((OUT,), jnp.float32),       # LayerNorm weight (default init)
        "ln_b": jnp.zeros((OUT,), jnp.float32),      # LayerNorm bias (default init)
        "W1": unif(ks[3], (OUT, OUT), stdv_out),
        "b1": unif(ks[4], (OUT,), stdv_out),
        "W2": unif(ks[5], (OUT, OUT), stdv_out),
        "b2": unif(ks[6], (OUT,), stdv_out),
    }
    x = jax.random.normal(ks[7], (S, B, IN), jnp.float32)   # PyTorch layout (seq, batch, in)

    out = jax.block_until_ready(last_atten(x, params))
    assert out.shape == (B, 1, OUT)

    # Pure-JAX reference of the PyTorch forward (eval mode).
    xb = jnp.transpose(x, (1, 0, 2))
    k = xb @ params["Kw"].T
    v = xb @ params["Vw"].T
    qv = params["q"] / math.sqrt(OUT)
    scores = jnp.einsum("d,bsd->bs", qv, k)
    attn = jax.nn.softmax(scores, axis=1)[:, None, :]
    pooled = attn @ v
    mu = pooled.mean(-1, keepdims=True)
    var = ((pooled - mu) ** 2).mean(-1, keepdims=True)
    ln = (pooled - mu) / jnp.sqrt(var + 1e-5) * params["ln_g"] + params["ln_b"]
    h = jax.nn.relu(ln @ params["W1"].T + params["b1"])
    ref = h @ params["W2"].T + params["b2"]

    assert jnp.allclose(out, ref, rtol=1e-4, atol=1e-4), "mismatch vs reference"
    print("KERNEL_OK")
</pallas_src>

<mosaic_0001>
module attributes {stable_mosaic.version = 11 : i64} {
  func.func @last_atten_kernel(%arg0: i32, %arg1: memref<16x32xf32, #tpu.memory_space<vmem>>, %arg2: memref<32x64xf32, #tpu.memory_space<vmem>>, %arg3: memref<8x32xf32, #tpu.memory_space<vmem>>, %arg4: memref<32x32xf32, #tpu.memory_space<vmem>>, %arg5: memref<32x32xf32, #tpu.memory_space<vmem>>, %arg6: memref<2x32xf32, #tpu.memory_space<vmem>>) attributes {dimension_semantics = [#tpu.dimension_semantics<parallel>], iteration_bounds = array<i64: 1>, scalar_prefetch = 0 : i64, scratch_operands = 0 : i64, tpu.core_type = #tpu.core_type<tc>, window_params = [{transform_indices = @transform_0, window_bounds = array<i64: 16, 32>}, {pipeline_mode = #tpu.pipeline_mode<synchronous>, transform_indices = @transform_1, window_bounds = array<i64: 32, 64>}, {pipeline_mode = #tpu.pipeline_mode<synchronous>, transform_indices = @transform_2, window_bounds = array<i64: 8, 32>}, {pipeline_mode = #tpu.pipeline_mode<synchronous>, transform_indices = @transform_3, window_bounds = array<i64: 32, 32>}, {pipeline_mode = #tpu.pipeline_mode<synchronous>, transform_indices = @transform_4, window_bounds = array<i64: 32, 32>}, {transform_indices = @transform_5, window_bounds = array<i64: 2, 32>}]} {
    %c0 = arith.constant 0 : index
    %c0_0 = arith.constant 0 : index
    %0 = vector.load %arg1[%c0, %c0_0] : memref<16x32xf32, #tpu.memory_space<vmem>>, vector<16x32xf32>
    %c0_1 = arith.constant 0 : index
    %c0_2 = arith.constant 0 : index
    %1 = vector.load %arg2[%c0_1, %c0_2] : memref<32x64xf32, #tpu.memory_space<vmem>>, vector<32x64xf32>
    %cst = arith.constant dense<0.000000e+00> : vector<16x64xf32>
    %2 = tpu.matmul %0, %1, %cst {dimension_numbers = #tpu.dot_dimension_numbers<[1], [0], [0], [1], [0, 0, 1, 1], [], []>} : vector<16x32xf32>, vector<32x64xf32>, vector<16x64xf32> -> vector<16x64xf32>
    %3 = vector.shape_cast %2 : vector<16x64xf32> to vector<2x8x64xf32>
    %4 = vector.extract_strided_slice %3 {offsets = [0, 0, 0], sizes = [2, 8, 32], strides = [1, 1, 1]} : vector<2x8x64xf32> to vector<2x8x32xf32>
    %5 = vector.extract_strided_slice %3 {offsets = [0, 0, 32], sizes = [2, 8, 32], strides = [1, 1, 1]} : vector<2x8x64xf32> to vector<2x8x32xf32>
    %c0_3 = arith.constant 0 : index
    %c0_4 = arith.constant 0 : index
    %6 = vector.load %arg3[%c0_3, %c0_4] : memref<8x32xf32, #tpu.memory_space<vmem>>, vector<1x32xf32>
    %7 = vector.shape_cast %6 : vector<1x32xf32> to vector<1x1x32xf32>
    %8 = vector.broadcast %7 : vector<1x1x32xf32> to vector<2x8x32xf32>
    %9 = arith.mulf %4, %8 : vector<2x8x32xf32>
    %cst_5 = arith.constant dense<0.000000e+00> : vector<2x8xf32>
    %10 = vector.multi_reduction <add>, %9, %cst_5 [2] : vector<2x8x32xf32> to vector<2x8xf32>
    %11 = vector.shape_cast %10 : vector<2x8xf32> to vector<2x8x1xf32>
    %cst_6 = arith.constant dense<0xFF800000> : vector<2x1xf32>
    %12 = vector.multi_reduction <maximumf>, %11, %cst_6 [1] : vector<2x8x1xf32> to vector<2x1xf32>
    %13 = vector.shape_cast %12 : vector<2x1xf32> to vector<2x1x1xf32>
    %14 = vector.broadcast %13 : vector<2x1x1xf32> to vector<2x8x1xf32>
    %15 = arith.subf %11, %14 : vector<2x8x1xf32>
    %16 = math.exp %15 : vector<2x8x1xf32>
    %cst_7 = arith.constant dense<0.000000e+00> : vector<2x1xf32>
    %17 = vector.multi_reduction <add>, %16, %cst_7 [1] : vector<2x8x1xf32> to vector<2x1xf32>
    %18 = vector.shape_cast %17 : vector<2x1xf32> to vector<2x1x1xf32>
    %19 = vector.broadcast %18 : vector<2x1x1xf32> to vector<2x8x1xf32>
    %20 = arith.divf %16, %19 : vector<2x8x1xf32>
    %21 = vector.broadcast %20 : vector<2x8x1xf32> to vector<2x8x32xf32>
    %22 = arith.mulf %21, %5 : vector<2x8x32xf32>
    %cst_8 = arith.constant dense<0.000000e+00> : vector<2x32xf32>
    %23 = vector.multi_reduction <add>, %22, %cst_8 [1] : vector<2x8x32xf32> to vector<2x32xf32>
    %c1 = arith.constant 1 : index
    %c0_9 = arith.constant 0 : index
    %24 = vector.load %arg3[%c1, %c0_9] : memref<8x32xf32, #tpu.memory_space<vmem>>, vector<1x32xf32>
    %c2 = arith.constant 2 : index
    %c0_10 = arith.constant 0 : index
    %25 = vector.load %arg3[%c2, %c0_10] : memref<8x32xf32, #tpu.memory_space<vmem>>, vector<1x32xf32>
    %c3 = arith.constant 3 : index
    %c0_11 = arith.constant 0 : index
    %26 = vector.load %arg3[%c3, %c0_11] : memref<8x32xf32, #tpu.memory_space<vmem>>, vector<1x32xf32>
    %c4 = arith.constant 4 : index
    %c0_12 = arith.constant 0 : index
    %27 = vector.load %arg3[%c4, %c0_12] : memref<8x32xf32, #tpu.memory_space<vmem>>, vector<1x32xf32>
    %cst_13 = arith.constant dense<0.000000e+00> : vector<2xf32>
    %28 = vector.multi_reduction <add>, %23, %cst_13 [1] : vector<2x32xf32> to vector<2xf32>
    %29 = vector.shape_cast %28 : vector<2xf32> to vector<2x1xf32>
    %cst_14 = arith.constant 3.200000e+01 : f32
    %30 = vector.broadcast %cst_14 : f32 to vector<2x1xf32>
    %31 = arith.divf %29, %30 : vector<2x1xf32>
    %32 = vector.broadcast %31 : vector<2x1xf32> to vector<2x32xf32>
    %33 = arith.subf %23, %32 : vector<2x32xf32>
    %34 = arith.mulf %33, %33 : vector<2x32xf32>
    %cst_15 = arith.constant dense<0.000000e+00> : vector<2xf32>
    %35 = vector.multi_reduction <add>, %34, %cst_15 [1] : vector<2x32xf32> to vector<2xf32>
    %36 = vector.shape_cast %35 : vector<2xf32> to vector<2x1xf32>
    %cst_16 = arith.constant 3.200000e+01 : f32
    %37 = vector.broadcast %cst_16 : f32 to vector<2x1xf32>
    %38 = arith.divf %36, %37 : vector<2x1xf32>
    %39 = vector.broadcast %31 : vector<2x1xf32> to vector<2x32xf32>
    %40 = arith.subf %23, %39 : vector<2x32xf32>
    %cst_17 = arith.constant 9.99999974E-6 : f32
    %41 = vector.broadcast %cst_17 : f32 to vector<2x1xf32>
    %42 = arith.addf %38, %41 : vector<2x1xf32>
    %43 = math.rsqrt %42 : vector<2x1xf32>
    %44 = vector.broadcast %43 : vector<2x1xf32> to vector<2x32xf32>
    %45 = arith.mulf %40, %44 : vector<2x32xf32>
    %46 = vector.broadcast %24 : vector<1x32xf32> to vector<2x32xf32>
    %47 = arith.mulf %45, %46 : vector<2x32xf32>
    %48 = vector.broadcast %25 : vector<1x32xf32> to vector<2x32xf32>
    %49 = arith.addf %47, %48 : vector<2x32xf32>
    %c0_18 = arith.constant 0 : index
    %c0_19 = arith.constant 0 : index
    %50 = vector.load %arg4[%c0_18, %c0_19] : memref<32x32xf32, #tpu.memory_space<vmem>>, vector<32x32xf32>
    %cst_20 = arith.constant dense<0.000000e+00> : vector<2x32xf32>
    %51 = tpu.matmul %49, %50, %cst_20 {dimension_numbers = #tpu.dot_dimension_numbers<[1], [0], [0], [1], [0, 0, 1, 1], [], []>} : vector<2x32xf32>, vector<32x32xf32>, vector<2x32xf32> -> vector<2x32xf32>
    %52 = vector.broadcast %26 : vector<1x32xf32> to vector<2x32xf32>
    %53 = arith.addf %51, %52 : vector<2x32xf32>
    %cst_21 = arith.constant 0.000000e+00 : f32
    %54 = vector.broadcast %cst_21 : f32 to vector<2x32xf32>
    %55 = arith.maximumf %53, %54 : vector<2x32xf32>
    %c0_22 = arith.constant 0 : index
    %c0_23 = arith.constant 0 : index
    %56 = vector.load %arg5[%c0_22, %c0_23] : memref<32x32xf32, #tpu.memory_space<vmem>>, vector<32x32xf32>
    %cst_24 = arith.constant dense<0.000000e+00> : vector<2x32xf32>
    %57 = tpu.matmul %55, %56, %cst_24 {dimension_numbers = #tpu.dot_dimension_numbers<[1], [0], [0], [1], [0, 0, 1, 1], [], []>} : vector<2x32xf32>, vector<32x32xf32>, vector<2x32xf32> -> vector<2x32xf32>
    %58 = vector.broadcast %27 : vector<1x32xf32> to vector<2x32xf32>
    %59 = arith.addf %57, %58 : vector<2x32xf32>
    %c0_25 = arith.constant 0 : index
    %c0_26 = arith.constant 0 : index
    %60 = vector.load %arg6[%c0_25, %c0_26] : memref<2x32xf32, #tpu.memory_space<vmem>>, vector<2x32xf32>
    tpu.vector_store %arg6[%c0_25, %c0_26], %59 {strides = array<i32>} : memref<2x32xf32, #tpu.memory_space<vmem>>, vector<2x32xf32>,
    return
  }
  func.func @transform_0(%arg0: i32) -> (i32, i32) {
    %c0_i32 = arith.constant 0 : i32
    %c0_i32_0 = arith.constant 0 : i32
    return %arg0, %c0_i32 : i32, i32
  }
  func.func @transform_1(%arg0: i32) -> (i32, i32) {
    %c0_i32 = arith.constant 0 : i32
    %c0_i32_0 = arith.constant 0 : i32
    %c0_i32_1 = arith.constant 0 : i32
    return %c0_i32, %c0_i32_0 : i32, i32
  }
  func.func @transform_2(%arg0: i32) -> (i32, i32) {
    %c0_i32 = arith.constant 0 : i32
    %c0_i32_0 = arith.constant 0 : i32
    %c0_i32_1 = arith.constant 0 : i32
    return %c0_i32, %c0_i32_0 : i32, i32
  }
  func.func @transform_3(%arg0: i32) -> (i32, i32) {
    %c0_i32 = arith.constant 0 : i32
    %c0_i32_0 = arith.constant 0 : i32
    %c0_i32_1 = arith.constant 0 : i32
    return %c0_i32, %c0_i32_0 : i32, i32
  }
  func.func @transform_4(%arg0: i32) -> (i32, i32) {
    %c0_i32 = arith.constant 0 : i32
    %c0_i32_0 = arith.constant 0 : i32
    %c0_i32_1 = arith.constant 0 : i32
    return %c0_i32, %c0_i32_0 : i32, i32
  }
  func.func @transform_5(%arg0: i32) -> (i32, i32) {
    %c0_i32 = arith.constant 0 : i32
    %c0_i32_0 = arith.constant 0 : i32
    return %arg0, %c0_i32 : i32, i32
  }
}

</mosaic_0001>

<llo_original>
// kernel: tpu_custom_call.1
$region0: #{tpu_custom_call.1}
  #allocation0 [shape = 'u32[]', space=smem, size = 0x4, offset = 0x4, fixed_abs, tag = 'smem constant byte address 0x4 - core index']
  #allocation1 [shape = 'u32[144,128]{1,0:T(1,128)}', space=vmem, size = 0x12000, scoped, tag = 'internal scratch']
  %s0 = inlined_call_operand.hbm [shape: f32[16,32], index: 0, kind: input, shape index: {}]
  %s1 = inlined_call_operand.hbm [shape: f32[32,64], index: 1, kind: input, shape index: {}]
  %s2 = inlined_call_operand.hbm [shape: f32[8,32], index: 2, kind: input, shape index: {}]
  %s3 = inlined_call_operand.hbm [shape: f32[32,32], index: 3, kind: input, shape index: {}]
  %s4 = inlined_call_operand.hbm [shape: f32[32,32], index: 4, kind: input, shape index: {}]
  %s5 = inlined_call_operand.hbm [shape: f32[2,32], index: 5, kind: output, shape index: {}]
  %s6 = sld [smem:[#allocation0]]
  $region50: #{tpu_custom_call.1} parent=0
    _
  %s8 = ssub.s32 1, %s6
  %s9 = scalar_select 0, %s8, %s6
  $region1: #{tpu_custom_call.1} parent=0
    #allocation2 [shape = 'u8[8192]{0}', space=vmem, size = 0x2000, scoped, tag = 'input window, operand 0, single buffered']
    #allocation3 [shape = 's32[1]{0}', space=sflag, size = 0x4, scoped, tag = 'scoped memory for tpu_custom_call.1']
    #allocation4 [shape = 's32[1]{0}', space=sflag, size = 0x4, scoped, tag = 'scoped memory for tpu_custom_call.1']
    #allocation5 [shape = 'u8[16384]{0}', space=vmem, size = 0x4000, scoped, tag = 'input window, operand 1, single buffered']
    #allocation6 [shape = 's32[1]{0}', space=sflag, size = 0x4, scoped, tag = 'scoped memory for tpu_custom_call.1']
    #allocation7 [shape = 'u8[4096]{0}', space=vmem, size = 0x1000, scoped, tag = 'input window, operand 2, single buffered']
    #allocation8 [shape = 'u8[16384]{0}', space=vmem, size = 0x4000, scoped, tag = 'input window, operand 3, single buffered']
    #allocation9 [shape = 's32[1]{0}', space=sflag, size = 0x4, scoped, tag = 'scoped memory for tpu_custom_call.1']
    #allocation10 [shape = 'u8[16384]{0}', space=vmem, size = 0x4000, scoped, tag = 'input window, operand 4, single buffered']
    #allocation11 [shape = 'u8[1024]{0}', space=vmem, size = 0x400, scoped, tag = 'output window, operand 0, single buffered']
    %10 = vsyncpa [#allocation3], 0
    %11 = vsyncpa [#allocation6], 0
    %12 = vsyncpa [#allocation9], 0
    %13 = vsyncpa [#allocation4], 0
    // Predicated region
    $region2: #{tpu_custom_call.1} parent=1 // pred_check
      _
    $region3: #{tpu_custom_call.1} parent=1 // pred_check_branch
      %15 = sbr.rel (0) target = $region5
    $region4: #{tpu_custom_call.1} parent=1 // pred_region
      %s17 = ssub.s32 256, 256
      %18 = vsyncadd [#allocation3], %s17
      %s19 = sshll.u32 [#allocation2], 4
      %s20 = int_to_ptr.vmem [resolvable:$true] %s19
      %25 = dma.hbm_to_vmem [thread:$0]  %s0, 256, %s20, [#allocation3], 128, 128, 8
    $region5: #{tpu_custom_call.1} parent=1 // pred_fallthru
      _
    // Predicated region
    $region6: #{tpu_custom_call.1} parent=1 // pred_check
      _
    $region7: #{tpu_custom_call.1} parent=1 // pred_check_branch
      %27 = sbr.rel (0) target = $region9
    $region8: #{tpu_custom_call.1} parent=1 // pred_region
      %s29 = ssub.s32 512, 512
      %30 = vsyncadd [#allocation6], %s29
      %s31 = sshll.u32 [#allocation5], 4
      %s32 = int_to_ptr.vmem [resolvable:$true] %s31
      %37 = dma.hbm_to_vmem [thread:$0]  %s1, 512, %s32, [#allocation6], 128, 128, 8
    $region9: #{tpu_custom_call.1} parent=1 // pred_fallthru
      _
    // Predicated region
    $region10: #{tpu_custom_call.1} parent=1 // pred_check
      _
    $region11: #{tpu_custom_call.1} parent=1 // pred_check_branch
      %39 = sbr.rel (0) target = $region13
    $region12: #{tpu_custom_call.1} parent=1 // pred_region
      %s41 = ssub.s32 128, 128
      %42 = vsyncadd [#allocation6], %s41
      %s44 = sshll.u32 [#allocation7], 4
      %s45 = int_to_ptr.vmem [resolvable:$true] %s44
      %47 = dma.hbm_to_vmem [thread:$0]  %s2, 128, %s45, [#allocation6]
    $region13: #{tpu_custom_call.1} parent=1 // pred_fallthru
      _
    // Predicated region
    $region14: #{tpu_custom_call.1} parent=1 // pred_check
      _
    $region15: #{tpu_custom_call.1} parent=1 // pred_check_branch
      %49 = sbr.rel (0) target = $region17
    $region16: #{tpu_custom_call.1} parent=1 // pred_region
      %s51 = ssub.s32 512, 512
      %52 = vsyncadd [#allocation9], %s51
      %s53 = sshll.u32 [#allocation8], 4
      %s54 = int_to_ptr.vmem [resolvable:$true] %s53
      %59 = dma.hbm_to_vmem [thread:$0]  %s3, 512, %s54, [#allocation9], 128, 128, 8
    $region17: #{tpu_custom_call.1} parent=1 // pred_fallthru
      _
    // Predicated region
    $region18: #{tpu_custom_call.1} parent=1 // pred_check
      _
    $region19: #{tpu_custom_call.1} parent=1 // pred_check_branch
      %61 = sbr.rel (0) target = $region21
    $region20: #{tpu_custom_call.1} parent=1 // pred_region
      %s63 = ssub.s32 512, 512
      %64 = vsyncadd [#allocation9], %s63
      %s65 = sshll.u32 [#allocation10], 4
      %s66 = int_to_ptr.vmem [resolvable:$true] %s65
      %71 = dma.hbm_to_vmem [thread:$0]  %s4, 512, %s66, [#allocation9], 128, 128, 8
    $region21: #{tpu_custom_call.1} parent=1 // pred_fallthru
      _
    // Predicated region
    $region22: #{tpu_custom_call.1} parent=1 // pred_check
      _
    $region23: #{tpu_custom_call.1} parent=1 // pred_check_branch
      %73 = sbr.rel (0) target = $region25
    $region24: #{tpu_custom_call.1} parent=1 // pred_region
      %74 = dma.done [#allocation3], 256
    $region25: #{tpu_custom_call.1} parent=1 // pred_fallthru
      _
    // Predicated region
    $region26: #{tpu_custom_call.1} parent=1 // pred_check
      _
    $region27: #{tpu_custom_call.1} parent=1 // pred_check_branch
      %76 = sbr.rel (0) target = $region29
    $region28: #{tpu_custom_call.1} parent=1 // pred_region
      %77 = dma.done [#allocation6], 512
    $region29: #{tpu_custom_call.1} parent=1 // pred_fallthru
      _
    // Predicated region
    $region30: #{tpu_custom_call.1} parent=1 // pred_check
      _
    $region31: #{tpu_custom_call.1} parent=1 // pred_check_branch
      %79 = sbr.rel (0) target = $region33
    $region32: #{tpu_custom_call.1} parent=1 // pred_region
      %80 = dma.done [#allocation6], 128
    $region33: #{tpu_custom_call.1} parent=1 // pred_fallthru
      _
    // Predicated region
    $region34: #{tpu_custom_call.1} parent=1 // pred_check
      _
    $region35: #{tpu_custom_call.1} parent=1 // pred_check_branch
      %82 = sbr.rel (0) target = $region37
    $region36: #{tpu_custom_call.1} parent=1 // pred_region
      %83 = dma.done [#allocation9], 512
    $region37: #{tpu_custom_call.1} parent=1 // pred_fallthru
      _
    // Predicated region
    $region38: #{tpu_custom_call.1} parent=1 // pred_check
      _
    $region39: #{tpu_custom_call.1} parent=1 // pred_check_branch
      %85 = sbr.rel (0) target = $region41
    $region40: #{tpu_custom_call.1} parent=1 // pred_region
      %86 = dma.done [#allocation9], 512
    $region41: #{tpu_custom_call.1} parent=1 // pred_fallthru
      _
    %v87 = vld [vmem:[#allocation2] sm:$0xff]
    %v88 = vld [vmem:[#allocation2 + $0x8] sm:$0xff]
    %v89 = vld [vmem:[#allocation5] sm:$0xff]
    %v90 = vld [vmem:[#allocation5 + $0x8] sm:$0xff]
    %v91 = vld [vmem:[#allocation5 + $0x10] sm:$0xff]
    %v92 = vld [vmem:[#allocation5 + $0x18] sm:$0xff]
    %vm93 = vcmask 261120
    %v95 = vsel %vm93, %v87, 0
    %v98 = vsel %vm93, %v88, 0
    %100 = vmatprep.subr.mxu0 0.0
    %101 = vmatpush1.msra.mxu0 %v89
    %102 = vmatprep.subr.mxu0 0.0
    %103 = vmatpush1.msra.mxu0 %v90
    %104 = vmatprep.subr.mxu0 0.0
    %105 = vmatpush1.msra.mxu0 %v91
    %106 = vmatprep.subr.mxu0 0.0
    %107 = vmatpush1.msra.mxu0 %v92
    %108 = vmatprep.subr.mxu0 0.0
    %109 = vmatpush1.msra.mxu0 0.0
    %110 = vmatprep.subr.mxu0 0.0
    %111 = vmatpush1.msra.mxu0 0.0
    %112 = vmatprep.subr.mxu0 0.0
    %113 = vmatpush1.msra.mxu0 0.0
    %114 = vmatprep.subr.mxu0 0.0
    %115 = vmatpush1.msra.mxu0 0.0
    %116 = vmatprep.subr.mxu0 0.0
    %117 = vmatpush1.msra.mxu0 0.0
    %118 = vmatprep.subr.mxu0 0.0
    %119 = vmatpush1.msra.mxu0 0.0
    %120 = vmatprep.subr.mxu0 0.0
    %121 = vmatpush1.msra.mxu0 0.0
    %122 = vmatprep.subr.mxu0 0.0
    %123 = vmatpush1.msra.mxu0 0.0
    %124 = vmatprep.subr.mxu0 0.0
    %125 = vmatpush1.msra.mxu0 0.0
    %126 = vmatprep.subr.mxu0 0.0
    %127 = vmatpush1.msra.mxu0 0.0
    %128 = vmatprep.subr.mxu0 0.0
    %129 = vmatpush1.msra.mxu0 0.0
    %130 = vmatprep.subr.mxu0 0.0
    %131 = vmatpush1.msra.mxu0 0.0
    %132 = vmatprep.subr.mxu0 0.0
    %133 = vmatpush1.msra.mxu0 0.0
    %134 = vmatprep.subr.mxu0 0.0
    %135 = vmatpush1.msra.mxu0 0.0
    %136 = vmatprep.subr.mxu0 0.0
    %137 = vmatpush1.msra.mxu0 0.0
    %138 = vmatprep.subr.mxu0 0.0
    %139 = vmatpush1.msra.mxu0 0.0
    %140 = vmatprep.subr.mxu0 0.0
    %141 = vmatpush1.msra.mxu0 0.0
    %142 = vmatprep.subr.mxu0 0.0
    %143 = vmatpush1.msra.mxu0 0.0
    %144 = vmatprep.subr.mxu0 0.0
    %145 = vmatpush1.msra.mxu0 0.0
    %146 = vmatprep.subr.mxu0 0.0
    %147 = vmatpush1.msra.mxu0 0.0
    %148 = vmatprep.subr.mxu0 0.0
    %149 = vmatpush1.msra.mxu0 0.0
    %150 = vmatprep.subr.mxu0 0.0
    %151 = vmatpush1.msra.mxu0 0.0
    %152 = vmatprep.subr.mxu0 0.0
    %153 = vmatpush1.msra.mxu0 0.0
    %154 = vmatprep.subr.mxu0 0.0
    %155 = vmatpush1.msra.mxu0 0.0
    %156 = vmatprep.subr.mxu0 0.0
    %157 = vmatpush1.msra.mxu0 0.0
    %158 = vmatprep.subr.mxu0 0.0
    %159 = vmatpush1.msra.mxu0 0.0
    %160 = vmatprep.subr.mxu0 0.0
    %161 = vmatpush1.msra.mxu0 0.0
    %162 = vmatprep.subr.mxu0 0.0
    %163 = vmatpush1.msra.mxu0 0.0
    %164 = vmatprep.mubr.f32.mxu0 0.0
    %165 = vmatmul.mubr.f32.gmra.mrb[0].mxu0 %v95
    %v166 = vpop.f32.mrb[0].mxu0
    %v167 = vadd.f32 0.0, %v166
    %v168 = vpop.f32.mrb[0].mxu0
    %169 = vmatprep.mubr.f32.mxu0 0.0
    %170 = vmatmul.mubr.f32.gmra.mrb[0].mxu0 %v98
    %v171 = vpop.f32.mrb[0].mxu0
    %v172 = vadd.f32 0.0, %v171
    %v173 = vpop.f32.mrb[0].mxu0
    %174 = vdwg.mxu0
    %v175 = vld [vmem:[#allocation7] sm:$0x1]
    %v176 = vlaneseq
    %v177 = vshrl.u32 %v176, 7
    %v178 = vsub.s32 0, %v177
    %v179 = vrot.slane %v175, %v178
    %v180 = vmul.f32 %v167, %v179
    %v181 = vmul.f32 %v172, %v179
    %v182 = vsel %vm93, %v180, 0.0
    %183 = vadd.xlane.f32.xlu0 %v182
    %v184 = vpop.xlane.xlu0 %183
    %v185 = vsel %vm93, %v181, 0.0
    %186 = vadd.xlane.f32.xlu0 %v185
    %v187 = vpop.xlane.xlu0 %186
    %v188 = vrot.slane %v184, 4
    %v189 = vmax.f32 %v184, %v188
    %v190 = vrot.slane %v189, 2
    %v191 = vmax.f32 %v189, %v190
    %v192 = vrot.slane %v191, 1
    %v193 = vmax.f32 %v191, %v192
    %v194 = vrot.slane %v187, 4
    %v195 = vmax.f32 %v187, %v194
    %v196 = vrot.slane %v195, 2
    %v197 = vmax.f32 %v195, %v196
    %v198 = vrot.slane %v197, 1
    %v199 = vmax.f32 %v197, %v198
    %v200 = vsub.f32 %v184, %v193
    %v201 = vsub.f32 %v187, %v199
    %v202 = vmul.f32 %v200, 1.442695
    %v203 = vpow.pop %v202
    %v204 = vmul.f32 %v201, 1.442695
    %v205 = vpow.pop %v204
    %v206 = vrot.slane %v203, 4
    %v207 = vadd.f32 %v203, %v206
    %v208 = vrot.slane %v207, 2
    %v209 = vadd.f32 %v207, %v208
    %v210 = vrot.slane %v209, 1
    %v211 = vadd.f32 %v209, %v210
    %v212 = vrot.slane %v205, 4
    %v213 = vadd.f32 %v205, %v212
    %v214 = vrot.slane %v213, 2
    %v215 = vadd.f32 %v213, %v214
    %v216 = vrot.slane %v215, 1
    %v217 = vadd.f32 %v215, %v216
    %v218 = vrcp.pop %v211
    %v219 = vmul.f32 %v203, %v218
    %v220 = vrcp.pop %v217
    %v221 = vmul.f32 %v205, %v220
    %v222 = vmul.f32 %v219, %v167
    %v223 = vmul.f32 %v221, %v172
    %vm224 = vcmask 523520
    %v225 = vsel %vm224, %v222, 0.0
    %v226 = vrot.slane %v225, 4
    %v227 = vadd.f32 %v225, %v226
    %v228 = vrot.slane %v227, 2
    %v229 = vadd.f32 %v227, %v228
    %v230 = vrot.slane %v229, 1
    %v231 = vadd.f32 %v229, %v230
    %v232 = vsel %vm224, %v223, 0.0
    %v233 = vrot.slane %v232, 4
    %v234 = vadd.f32 %v232, %v233
    %v235 = vrot.slane %v234, 2
    %v236 = vadd.f32 %v234, %v235
    %v237 = vrot.slane %v236, 1
    %v238 = vadd.f32 %v236, %v237
    %v239 = vld [vmem:[#allocation7 + $0x1] sm:$0x1]
    %v240 = vld [vmem:[#allocation7 + $0x2] sm:$0x1]
    %v241 = vld [vmem:[#allocation7 + $0x3] sm:$0x1]
    %v242 = vld [vmem:[#allocation7 + $0x4] sm:$0x1]
    %vm245 = vcmask 1041409
    %v246 = vsel %vm245, %v238, %v231
    %247 = vrot.lane.b32.xlu0 %v246, 96
    %v248 = vpop.permute.xlu0 %247
    %vm250 = vcmask 254976
    %v251 = vsel %vm250, %v248, 0.0
    %252 = vadd.xlane.f32.xlu0 %v251
    %v253 = vpop.xlane.xlu0 %252
    %v254 = vrcp.pop 32.0
    %v255 = vmul.f32 %v253, %v254
    %v257 = vrot.slane %v255, 1
    %v260 = vsub.f32 %v231, %v255
    %v261 = vsub.f32 %v238, %v257
    %v262 = vmul.f32 %v260, %v260
    %v263 = vmul.f32 %v261, %v261
    %v266 = vrot.slane %v263, 7
    %v267 = vsel %vm245, %v266, %v262
    %268 = vrot.lane.b32.xlu0 %v267, 96
    %v269 = vpop.permute.xlu0 %268
    %v271 = vsel %vm250, %v269, 0.0
    %272 = vadd.xlane.f32.xlu0 %v271
    %v273 = vpop.xlane.xlu0 %272
    %v274 = vmul.f32 %v273, %v254
    %v275 = vadd.f32 %v274, 1e-05
    %v276 = vrsqrt.pop %v275
    %v278 = vrot.slane %v276, 1
    %v281 = vmul.f32 %v260, %v276
    %v282 = vmul.f32 %v261, %v278
    %v283 = vlaneseq
    %v284 = vshrl.u32 %v283, 7
    %v285 = vsub.s32 0, %v284
    %v286 = vrot.slane %v239, %v285
    %288 = vrot.lane.b32.xlu0 %v286, 32
    %v289 = vpop.permute.xlu0 %288
    %v291 = vmul.f32 %v281, %v289
    %v292 = vmul.f32 %v282, %v289
    %v293 = vlaneseq
    %v294 = vshrl.u32 %v293, 7
    %v295 = vsub.s32 0, %v294
    %v296 = vrot.slane %v240, %v295
    %298 = vrot.lane.b32.xlu0 %v296, 32
    %v299 = vpop.permute.xlu0 %298
    %v301 = vadd.f32 %v291, %v299
    %v302 = vadd.f32 %v292, %v299
    %v303 = vld [vmem:[#allocation8] sm:$0xff]
    %v304 = vld [vmem:[#allocation8 + $0x8] sm:$0xff]
    %v305 = vld [vmem:[#allocation8 + $0x10] sm:$0xff]
    %v306 = vld [vmem:[#allocation8 + $0x18] sm:$0xff]
    %v307 = vlaneseq
    %v308 = vshrl.u32 %v307, 7
    %v309 = vsub.s32 0, %v308
    %v310 = vrot.slane %v241, %v309
    %v313 = vrot.slane %v302, 7
    %v314 = vsel %vm245, %v313, %v301
    %315 = vrot.lane.b32.xlu0 %v314, 96
    %v316 = vpop.permute.xlu0 %315
    %v317 = vsel %vm93, %v316, 0
    %319 = vmatprep.subr.mxu0 0.0
    %320 = vmatpush1.msra.mxu0 %v303
    %321 = vmatprep.subr.mxu0 0.0
    %322 = vmatpush1.msra.mxu0 %v304
    %323 = vmatprep.subr.mxu0 0.0
    %324 = vmatpush1.msra.mxu0 %v305
    %325 = vmatprep.subr.mxu0 0.0
    %326 = vmatpush1.msra.mxu0 %v306
    %327 = vmatprep.subr.mxu0 0.0
    %328 = vmatpush1.msra.mxu0 0.0
    %329 = vmatprep.subr.mxu0 0.0
    %330 = vmatpush1.msra.mxu0 0.0
    %331 = vmatprep.subr.mxu0 0.0
    %332 = vmatpush1.msra.mxu0 0.0
    %333 = vmatprep.subr.mxu0 0.0
    %334 = vmatpush1.msra.mxu0 0.0
    %335 = vmatprep.subr.mxu0 0.0
    %336 = vmatpush1.msra.mxu0 0.0
    %337 = vmatprep.subr.mxu0 0.0
    %338 = vmatpush1.msra.mxu0 0.0
    %339 = vmatprep.subr.mxu0 0.0
    %340 = vmatpush1.msra.mxu0 0.0
    %341 = vmatprep.subr.mxu0 0.0
    %342 = vmatpush1.msra.mxu0 0.0
    %343 = vmatprep.subr.mxu0 0.0
    %344 = vmatpush1.msra.mxu0 0.0
    %345 = vmatprep.subr.mxu0 0.0
    %346 = vmatpush1.msra.mxu0 0.0
    %347 = vmatprep.subr.mxu0 0.0
    %348 = vmatpush1.msra.mxu0 0.0
    %349 = vmatprep.subr.mxu0 0.0
    %350 = vmatpush1.msra.mxu0 0.0
    %351 = vmatprep.subr.mxu0 0.0
    %352 = vmatpush1.msra.mxu0 0.0
    %353 = vmatprep.subr.mxu0 0.0
    %354 = vmatpush1.msra.mxu0 0.0
    %355 = vmatprep.subr.mxu0 0.0
    %356 = vmatpush1.msra.mxu0 0.0
    %357 = vmatprep.subr.mxu0 0.0
    %358 = vmatpush1.msra.mxu0 0.0
    %359 = vmatprep.subr.mxu0 0.0
    %360 = vmatpush1.msra.mxu0 0.0
    %361 = vmatprep.subr.mxu0 0.0
    %362 = vmatpush1.msra.mxu0 0.0
    %363 = vmatprep.subr.mxu0 0.0
    %364 = vmatpush1.msra.mxu0 0.0
    %365 = vmatprep.subr.mxu0 0.0
    %366 = vmatpush1.msra.mxu0 0.0
    %367 = vmatprep.subr.mxu0 0.0
    %368 = vmatpush1.msra.mxu0 0.0
    %369 = vmatprep.subr.mxu0 0.0
    %370 = vmatpush1.msra.mxu0 0.0
    %371 = vmatprep.subr.mxu0 0.0
    %372 = vmatpush1.msra.mxu0 0.0
    %373 = vmatprep.subr.mxu0 0.0
    %374 = vmatpush1.msra.mxu0 0.0
    %375 = vmatprep.subr.mxu0 0.0
    %376 = vmatpush1.msra.mxu0 0.0
    %377 = vmatprep.subr.mxu0 0.0
    %378 = vmatpush1.msra.mxu0 0.0
    %379 = vmatprep.subr.mxu0 0.0
    %380 = vmatpush1.msra.mxu0 0.0
    %381 = vmatprep.subr.mxu0 0.0
    %382 = vmatpush1.msra.mxu0 0.0
    %383 = vmatprep.mubr.f32.mxu0 0.0
    %384 = vmatmul.mubr.f32.gmra.mrb[0].mxu0 %v317
    %v385 = vpop.f32.mrb[0].mxu0
    %v386 = vadd.f32 %v310, %v385
    %v387 = vpop.f32.mrb[0].mxu0
    %388 = vdwg.mxu0
    %v389 = vmax.f32 %v386, 0.0
    %v390 = vld [vmem:[#allocation10] sm:$0xff]
    %v391 = vld [vmem:[#allocation10 + $0x8] sm:$0xff]
    %v392 = vld [vmem:[#allocation10 + $0x10] sm:$0xff]
    %v393 = vld [vmem:[#allocation10 + $0x18] sm:$0xff]
    %v394 = vlaneseq
    %v395 = vshrl.u32 %v394, 7
    %v396 = vsub.s32 0, %v395
    %v397 = vrot.slane %v242, %v396
    %v399 = vsel %vm93, %v389, 0
    %401 = vmatprep.subr.mxu0 0.0
    %402 = vmatpush1.msra.mxu0 %v390
    %403 = vmatprep.subr.mxu0 0.0
    %404 = vmatpush1.msra.mxu0 %v391
    %405 = vmatprep.subr.mxu0 0.0
    %406 = vmatpush1.msra.mxu0 %v392
    %407 = vmatprep.subr.mxu0 0.0
    %408 = vmatpush1.msra.mxu0 %v393
    %409 = vmatprep.subr.mxu0 0.0
    %410 = vmatpush1.msra.mxu0 0.0
    %411 = vmatprep.subr.mxu0 0.0
    %412 = vmatpush1.msra.mxu0 0.0
    %413 = vmatprep.subr.mxu0 0.0
    %414 = vmatpush1.msra.mxu0 0.0
    %415 = vmatprep.subr.mxu0 0.0
    %416 = vmatpush1.msra.mxu0 0.0
    %417 = vmatprep.subr.mxu0 0.0
    %418 = vmatpush1.msra.mxu0 0.0
    %419 = vmatprep.subr.mxu0 0.0
    %420 = vmatpush1.msra.mxu0 0.0
    %421 = vmatprep.subr.mxu0 0.0
    %422 = vmatpush1.msra.mxu0 0.0
    %423 = vmatprep.subr.mxu0 0.0
    %424 = vmatpush1.msra.mxu0 0.0
    %425 = vmatprep.subr.mxu0 0.0
    %426 = vmatpush1.msra.mxu0 0.0
    %427 = vmatprep.subr.mxu0 0.0
    %428 = vmatpush1.msra.mxu0 0.0
    %429 = vmatprep.subr.mxu0 0.0
    %430 = vmatpush1.msra.mxu0 0.0
    %431 = vmatprep.subr.mxu0 0.0
    %432 = vmatpush1.msra.mxu0 0.0
    %433 = vmatprep.subr.mxu0 0.0
    %434 = vmatpush1.msra.mxu0 0.0
    %435 = vmatprep.subr.mxu0 0.0
    %436 = vmatpush1.msra.mxu0 0.0
    %437 = vmatprep.subr.mxu0 0.0
    %438 = vmatpush1.msra.mxu0 0.0
    %439 = vmatprep.subr.mxu0 0.0
    %440 = vmatpush1.msra.mxu0 0.0
    %441 = vmatprep.subr.mxu0 0.0
    %442 = vmatpush1.msra.mxu0 0.0
    %443 = vmatprep.subr.mxu0 0.0
    %444 = vmatpush1.msra.mxu0 0.0
    %445 = vmatprep.subr.mxu0 0.0
    %446 = vmatpush1.msra.mxu0 0.0
    %447 = vmatprep.subr.mxu0 0.0
    %448 = vmatpush1.msra.mxu0 0.0
    %449 = vmatprep.subr.mxu0 0.0
    %450 = vmatpush1.msra.mxu0 0.0
    %451 = vmatprep.subr.mxu0 0.0
    %452 = vmatpush1.msra.mxu0 0.0
    %453 = vmatprep.subr.mxu0 0.0
    %454 = vmatpush1.msra.mxu0 0.0
    %455 = vmatprep.subr.mxu0 0.0
    %456 = vmatpush1.msra.mxu0 0.0
    %457 = vmatprep.subr.mxu0 0.0
    %458 = vmatpush1.msra.mxu0 0.0
    %459 = vmatprep.subr.mxu0 0.0
    %460 = vmatpush1.msra.mxu0 0.0
    %461 = vmatprep.subr.mxu0 0.0
    %462 = vmatpush1.msra.mxu0 0.0
    %463 = vmatprep.subr.mxu0 0.0
    %464 = vmatpush1.msra.mxu0 0.0
    %465 = vmatprep.mubr.f32.mxu0 0.0
    %466 = vmatmul.mubr.f32.gmra.mrb[0].mxu0 %v399
    %v467 = vpop.f32.mrb[0].mxu0
    %v468 = vadd.f32 %v397, %v467
    %v469 = vpop.f32.mrb[0].mxu0
    %470 = vdwg.mxu0
    %471 = vst.msk [vmem:[#allocation11] sm:$0x3] %vm250, %v468
    // Predicated region
    $region42: #{tpu_custom_call.1} parent=1 // pred_check
      _
    $region43: #{tpu_custom_call.1} parent=1 // pred_check_branch
      %473 = sbr.rel (0) target = $region45
    $region44: #{tpu_custom_call.1} parent=1 // pred_region
      %s475 = ssub.s32 32, 32
      %476 = vsyncadd [#allocation4], %s475
      %s478 = sshll.u32 [#allocation11], 4
      %s479 = int_to_ptr.vmem [resolvable:$true] %s478
      %481 = dma.vmem_to_hbm [thread:$0]  %s479, 32, %s5, [#allocation4]
    $region45: #{tpu_custom_call.1} parent=1 // pred_fallthru
      _
    // Predicated region
    $region46: #{tpu_custom_call.1} parent=1 // pred_check
      _
    $region47: #{tpu_custom_call.1} parent=1 // pred_check_branch
      %483 = sbr.rel (0) target = $region49
    $region48: #{tpu_custom_call.1} parent=1 // pred_region
      %484 = dma.done [#allocation4], 32
    $region49: #{tpu_custom_call.1} parent=1 // pred_fallthru
      _
    %485 = vsyncpa [#allocation3], 1
    %486 = vsyncpa [#allocation6], 1
    %487 = vsyncpa [#allocation9], 1
    %488 = vsyncpa [#allocation4], 1

</llo_original>
